<compile_context>
chip_gen: v7x
topology: tpu7x:2x2x1
jax: 0.10.0
libtpu: 0.0.40
codegen_flags: <defaults>
</compile_context>

<pallas_src>
import math
import numpy as np

import jax
import jax.numpy as jnp
from jax.experimental import pallas as pl
from jax.experimental.pallas import tpu as pltpu

_MIB = 1024 * 1024


# ----------------------------------------------------------------------------
# Parameter construction (matches PyTorch MultiSpectralDCTLayer.get_dct_filter)
# ----------------------------------------------------------------------------
def get_freq_indices(method):
    assert method in ['top1', 'top2', 'top4', 'top8', 'top16', 'top32',
                      'bot1', 'bot2', 'bot4', 'bot8', 'bot16', 'bot32',
                      'low1', 'low2', 'low4', 'low8', 'low16', 'low32']
    num_freq = int(method[3:])
    if 'top' in method:
        all_top_indices_x = [0, 0, 6, 0, 0, 1, 1, 4, 5, 1, 3, 0, 0, 0, 3, 2,
                             4, 6, 3, 5, 5, 2, 6, 5, 5, 3, 3, 4, 2, 2, 6, 1]
        all_top_indices_y = [0, 1, 0, 5, 2, 0, 2, 0, 0, 6, 0, 4, 6, 3, 5, 2,
                             6, 3, 3, 3, 5, 1, 1, 2, 4, 2, 1, 1, 3, 0, 5, 3]
        mapper_x = all_top_indices_x[:num_freq]
        mapper_y = all_top_indices_y[:num_freq]
    elif 'low' in method:
        all_low_indices_x = [0, 0, 1, 1, 0, 2, 2, 1, 2, 0, 3, 4, 0, 1, 3, 0,
                             1, 2, 3, 4, 5, 0, 1, 2, 3, 4, 5, 6, 1, 2, 3, 4]
        all_low_indices_y = [0, 1, 0, 1, 2, 0, 1, 2, 2, 3, 0, 0, 4, 3, 1, 5,
                             4, 3, 2, 1, 0, 6, 5, 4, 3, 2, 1, 0, 6, 5, 4, 3]
        mapper_x = all_low_indices_x[:num_freq]
        mapper_y = all_low_indices_y[:num_freq]
    else:  # bot
        all_bot_indices_x = [6, 1, 3, 3, 2, 4, 1, 2, 4, 4, 5, 1, 4, 6, 2, 5,
                             6, 1, 6, 2, 2, 4, 3, 3, 5, 5, 6, 2, 5, 5, 3, 6]
        all_bot_indices_y = [6, 4, 4, 6, 6, 3, 1, 4, 4, 5, 6, 5, 2, 2, 5, 1,
                             4, 3, 5, 0, 3, 1, 1, 2, 4, 2, 1, 1, 5, 3, 3, 3]
        mapper_x = all_bot_indices_x[:num_freq]
        mapper_y = all_bot_indices_y[:num_freq]
    return mapper_x, mapper_y


def _build_filter(pos, freq, POS):
    result = math.cos(math.pi * freq * (pos + 0.5) / POS) / math.sqrt(POS)
    if freq == 0:
        return result
    return result * math.sqrt(2)


def get_dct_filter(tile_size_x, tile_size_y, mapper_x, mapper_y, channel):
    dct_filter = np.zeros((channel, tile_size_x, tile_size_y), dtype=np.float32)
    c_part = channel // len(mapper_x)
    for i, (u_x, v_y) in enumerate(zip(mapper_x, mapper_y)):
        for t_x in range(tile_size_x):
            for t_y in range(tile_size_y):
                dct_filter[i * c_part:(i + 1) * c_part, t_x, t_y] = (
                    _build_filter(t_x, u_x, tile_size_x)
                    * _build_filter(t_y, v_y, tile_size_y)
                )
    return dct_filter


# ----------------------------------------------------------------------------
# Hardware-aware tile selection
# ----------------------------------------------------------------------------
def _round_up(x, m):
    return ((x + m - 1) // m) * m


def _physical_vmem_bytes():
    """Per-core physical VMEM (v5e/v6e: 128 MiB, v7x: 64 MiB)."""
    try:
        info = pltpu.get_tpu_info()
        v = getattr(info, "vmem_capacity_bytes", None)
        if v:
            return int(v)
    except Exception:
        pass
    try:
        kind = jax.devices()[0].device_kind.lower()
        if "7" in kind:
            return 64 * _MIB
    except Exception:
        pass
    return 128 * _MIB


def _select_tiles(n, c, hw, itemsize, phys_vmem):
    """Pick (TN, TC) and an explicit vmem_limit_bytes.

    TC is 128 (lane-dense output store) or full-C when C <= 128; TN is a
    multiple of 8 grown until the x tile hits ~8 MiB (f32-equivalent) while
    keeping >= 4 grid steps for megacore balance.  Ragged trailing blocks are
    handled by a pl.cdiv grid, so tiles stay bounded for arbitrary N / C.
    """
    hw_pad = _round_up(hw, 128)                      # lanes the tile occupies

    # --- channel tile ---
    tc = c if c <= 128 else 128
    tc_sub = _round_up(tc, 8)
    tc_lane = _round_up(tc, 128)
    c_tiles = pl.cdiv(c, tc)

    # --- batch tile ---
    x_budget = min(8 * _MIB, phys_vmem // 8)         # f32-equivalent budget

    def x_f32_bytes(tn_):
        return tn_ * tc_sub * hw_pad * 4

    if n <= 8:
        tn = n                                       # full axis, tiny anyway
    else:
        tn = 8
        max_tn = _round_up(n, 8)
        while tn * 2 <= max_tn and x_f32_bytes(tn * 2) <= x_budget:
            # don't collapse the grid below 4 steps once it has >= 4
            if (pl.cdiv(n, 8) * c_tiles >= 4
                    and pl.cdiv(n, tn * 2) * c_tiles < 4):
                break
            tn *= 2

    # --- explicit VMEM budget: 2*x + 2*w + 2*out + f32 temp + margin ---
    x_bytes = tn * tc_sub * hw_pad * itemsize
    w_bytes = tc_sub * hw_pad * 4
    o_bytes = _round_up(tn, 8) * tc_lane * max(itemsize, 4)
    tmp_bytes = x_f32_bytes(tn) if itemsize < 4 else 0
    required = 2 * x_bytes + 2 * w_bytes + 2 * o_bytes + tmp_bytes + 2 * _MIB

    target = min(48 * _MIB, phys_vmem - 16 * _MIB)
    vmem_limit = min(max(required, target), phys_vmem - 4 * _MIB)
    # TODO(synk): if `required` still exceeds physical VMEM (gigantic H*W), an
    # HW-split accumulation grid axis would be needed.
    return tn, tc, int(vmem_limit)


# ----------------------------------------------------------------------------
# Pallas kernel: out[n, c] = sum_{hw} x[n, c, hw] * w_exp[c, hw]
# (VPU multiply + XLU lane reduce; f32 accumulation regardless of input dtype)
# ----------------------------------------------------------------------------
def _dct_reduce_kernel(x_ref, w_ref, o_ref):
    x = x_ref[...].astype(jnp.float32)          # (TN, TC, HW)
    w = w_ref[...]                              # (TC, HW) f32
    o_ref[...] = jnp.sum(x * w[None, :, :], axis=-1).astype(o_ref.dtype)


def dct_spectral_reduce(x, w_exp):
    """x: (N, C, H, W); w_exp: (C, H, W) f32 -> (N, C) in x.dtype."""
    n, c, h, w = x.shape
    assert w_exp.shape == (c, h, w)
    hw = h * w
    x_flat = x.reshape(n, c, hw)
    w_flat = w_exp.reshape(c, hw)

    phys_vmem = _physical_vmem_bytes()
    tn, tc, vmem_limit = _select_tiles(n, c, hw, x.dtype.itemsize, phys_vmem)

    # C on the outer (slow) grid axis, N inner: the (TC, HW) weight tile is
    # re-DMA'd only when the C-tile index changes.
    grid = (pl.cdiv(c, tc), pl.cdiv(n, tn))

    cost = pl.CostEstimate(
        flops=2 * n * c * hw,
        bytes_accessed=(x_flat.size * x.dtype.itemsize       # x read once
                        + c * hw * 4                          # weight, once/C-tile
                        + n * c * x.dtype.itemsize),          # output write
        transcendentals=0)

    return pl.pallas_call(
        _dct_reduce_kernel,
        out_shape=jax.ShapeDtypeStruct((n, c), x.dtype),
        grid=grid,
        in_specs=[
            pl.BlockSpec((tn, tc, hw), lambda ci, ni: (ni, ci, 0)),
            pl.BlockSpec((tc, hw), lambda ci, ni: (ci, 0)),
        ],
        out_specs=pl.BlockSpec((tn, tc), lambda ci, ni: (ni, ci)),
        compiler_params=pltpu.CompilerParams(
            dimension_semantics=("parallel", "parallel"),
            vmem_limit_bytes=vmem_limit),
        cost_estimate=cost,
    )(x_flat, w_flat)


# ----------------------------------------------------------------------------
# Full forward pass of MultiSpectralAttentionLayer
# (the excitation MLP is commented out in the PyTorch source, so the forward
#  returns the raw DCT features reshaped to (N, C, 1, 1))
# ----------------------------------------------------------------------------
class MultiSpectralAttentionLayerPallas:
    def __init__(self, channel, dct_h, dct_w, reduction=16, freq_sel_method='top16'):
        self.reduction = reduction      # kept for API parity (fc is disabled upstream)
        self.dct_h = dct_h
        self.dct_w = dct_w
        mapper_x, mapper_y = get_freq_indices(freq_sel_method)
        self.num_split = len(mapper_x)
        mapper_x = [tx * (dct_h // 7) for tx in mapper_x]
        mapper_y = [ty * (dct_w // 7) for ty in mapper_y]
        assert channel % len(mapper_x) == 0
        self.dct_filter = get_dct_filter(dct_h, dct_w, mapper_x, mapper_y, channel)
        self._weight_cache = {}

    def _expanded_weight(self, h, w):
        """DCT filter with the adaptive average pool folded in, so the kernel
        reads the original activation exactly once."""
        key = (h, w)
        if key not in self._weight_cache:
            if h == self.dct_h and w == self.dct_w:
                w_exp = self.dct_filter
            else:
                # TODO(synk): non-integer adaptive pooling ratios are not implemented.
                assert h % self.dct_h == 0 and w % self.dct_w == 0
                kh, kw = h // self.dct_h, w // self.dct_w
                w_exp = (np.repeat(np.repeat(self.dct_filter, kh, axis=1), kw, axis=2)
                         / np.float32(kh * kw))
            self._weight_cache[key] = jnp.asarray(w_exp, dtype=jnp.float32)
        return self._weight_cache[key]

    def __call__(self, x):
        n, c, h, w = x.shape
        w_exp = self._expanded_weight(h, w)
        feats = dct_spectral_reduce(x, w_exp)            # (N, C) in x.dtype
        return feats.reshape(n, c, 1, 1)


# ----------------------------------------------------------------------------
# Pure-JAX reference (mirrors the PyTorch forward: pool, multiply, sum)
# ----------------------------------------------------------------------------
def reference_forward(x, layer):
    n, c, h, w = x.shape
    x_pooled = x
    if h != layer.dct_h or w != layer.dct_w:
        kh, kw = h // layer.dct_h, w // layer.dct_w
        x_pooled = x.reshape(n, c, layer.dct_h, kh, layer.dct_w, kw).mean(axis=(3, 5))
    filt = jnp.asarray(layer.dct_filter)
    out = jnp.sum(x_pooled.astype(jnp.float32) * filt[None], axis=(2, 3))
    return out.astype(x.dtype).reshape(n, c, 1, 1)


if __name__ == "__main__":
    key = jax.random.PRNGKey(0)

    # Case 1: small shapes, pooling branch, full-dim (TN=N, TC=C) tiles.
    N1, C1, H1, W1 = 2, 16, 14, 14
    x1 = jax.random.normal(key, (N1, C1, H1, W1), dtype=jnp.float32)
    layer1 = MultiSpectralAttentionLayerPallas(
        channel=C1, dct_h=7, dct_w=7, reduction=16, freq_sel_method='top16')
    out1 = jax.block_until_ready(layer1(x1))
    ref1 = jax.block_until_ready(reference_forward(x1, layer1))
    assert out1.shape == (N1, C1, 1, 1)
    assert np.allclose(np.asarray(out1), np.asarray(ref1), rtol=1e-4, atol=2e-5), \
        "case 1 mismatch vs reference"

    # Case 2: lane-dense tiled path (TC=128, TN multiple of 8, multi-step grid)
    # exercising the resident-weight C-outer ordering.
    N2, C2, H2, W2 = 16, 256, 14, 14
    x2 = jax.random.normal(jax.random.fold_in(key, 1), (N2, C2, H2, W2),
                           dtype=jnp.float32)
    layer2 = MultiSpectralAttentionLayerPallas(
        channel=C2, dct_h=7, dct_w=7, reduction=16, freq_sel_method='top16')
    out2 = jax.block_until_ready(layer2(x2))
    ref2 = jax.block_until_ready(reference_forward(x2, layer2))
    assert out2.shape == (N2, C2, 1, 1)
    assert np.allclose(np.asarray(out2), np.asarray(ref2), rtol=1e-4, atol=2e-5), \
        "case 2 mismatch vs reference"

    # Case 3: small odd batch (N < 8) — bounded full-axis batch tile.
    N3, C3, H3, W3 = 5, 16, 14, 14
    x3 = jax.random.normal(jax.random.fold_in(key, 2), (N3, C3, H3, W3),
                           dtype=jnp.float32)
    layer3 = MultiSpectralAttentionLayerPallas(
        channel=C3, dct_h=7, dct_w=7, reduction=16, freq_sel_method='top16')
    out3 = jax.block_until_ready(layer3(x3))
    ref3 = jax.block_until_ready(reference_forward(x3, layer3))
    assert out3.shape == (N3, C3, 1, 1)
    assert np.allclose(np.asarray(out3), np.asarray(ref3), rtol=1e-4, atol=2e-5), \
        "case 3 mismatch vs reference"

    print("KERNEL_OK")
</pallas_src>

<mosaic_0001>
module attributes {stable_mosaic.version = 11 : i64} {
  func.func @_dct_reduce_kernel(%arg0: i32, %arg1: i32, %arg2: memref<2x16x196xf32, #tpu.memory_space<vmem>>, %arg3: memref<16x196xf32, #tpu.memory_space<vmem>>, %arg4: memref<2x16xf32, #tpu.memory_space<vmem>>) attributes {dimension_semantics = [#tpu.dimension_semantics<parallel>, #tpu.dimension_semantics<parallel>], iteration_bounds = array<i64: 1, 1>, scalar_prefetch = 0 : i64, scratch_operands = 0 : i64, tpu.core_type = #tpu.core_type<tc>, window_params = [{transform_indices = @transform_0, window_bounds = array<i64: 2, 16, 196>}, {transform_indices = @transform_1, window_bounds = array<i64: 16, 196>}, {transform_indices = @transform_2, window_bounds = array<i64: 2, 16>}]} {
    %c0 = arith.constant 0 : index
    %c0_0 = arith.constant 0 : index
    %c0_1 = arith.constant 0 : index
    %0 = vector.load %arg2[%c0, %c0_0, %c0_1] : memref<2x16x196xf32, #tpu.memory_space<vmem>>, vector<2x16x196xf32>
    %c0_2 = arith.constant 0 : index
    %c0_3 = arith.constant 0 : index
    %1 = vector.load %arg3[%c0_2, %c0_3] : memref<16x196xf32, #tpu.memory_space<vmem>>, vector<16x196xf32>
    %2 = vector.shape_cast %1 : vector<16x196xf32> to vector<1x16x196xf32>
    %3 = vector.broadcast %2 : vector<1x16x196xf32> to vector<2x16x196xf32>
    %4 = arith.mulf %0, %3 : vector<2x16x196xf32>
    %cst = arith.constant dense<0.000000e+00> : vector<2x16xf32>
    %5 = vector.multi_reduction <add>, %4, %cst [2] : vector<2x16x196xf32> to vector<2x16xf32>
    %c0_4 = arith.constant 0 : index
    %c0_5 = arith.constant 0 : index
    %6 = vector.load %arg4[%c0_4, %c0_5] : memref<2x16xf32, #tpu.memory_space<vmem>>, vector<2x16xf32>
    tpu.vector_store %arg4[%c0_4, %c0_5], %5 {strides = array<i32>} : memref<2x16xf32, #tpu.memory_space<vmem>>, vector<2x16xf32>,
    return
  }
  func.func @transform_0(%arg0: i32, %arg1: i32) -> (i32, i32, i32) {
    %c0_i32 = arith.constant 0 : i32
    %c0_i32_0 = arith.constant 0 : i32
    return %arg1, %arg0, %c0_i32 : i32, i32, i32
  }
  func.func @transform_1(%arg0: i32, %arg1: i32) -> (i32, i32) {
    %c0_i32 = arith.constant 0 : i32
    %c0_i32_0 = arith.constant 0 : i32
    return %arg0, %c0_i32 : i32, i32
  }
  func.func @transform_2(%arg0: i32, %arg1: i32) -> (i32, i32) {
    %c0_i32 = arith.constant 0 : i32
    return %arg1, %arg0 : i32, i32
  }
}

</mosaic_0001>

<llo_original>
// kernel: tpu_custom_call.1
$region0: #{tpu_custom_call.1}
  #allocation0 [shape = 'u32[]', space=smem, size = 0x4, offset = 0x4, fixed_abs, tag = 'smem constant byte address 0x4 - core index']
  #allocation1 [shape = 'u32[144,128]{1,0:T(1,128)}', space=vmem, size = 0x12000, scoped, tag = 'internal scratch']
  %s0 = inlined_call_operand.hbm [shape: f32[2,16,196], index: 0, kind: input, shape index: {}]
  %s1 = inlined_call_operand.hbm [shape: f32[16,196], index: 1, kind: input, shape index: {}]
  %s2 = inlined_call_operand.hbm [shape: f32[2,16], index: 2, kind: output, shape index: {}]
  %s3 = sld [smem:[#allocation0]]
  $region26: #{tpu_custom_call.1} parent=0
    _
  %s5 = ssub.s32 1, %s3
  %s6 = scalar_select 0, %s5, %s3
  $region1: #{tpu_custom_call.1} parent=0
    #allocation2 [shape = 'u8[32768]{0}', space=vmem, size = 0x8000, scoped, tag = 'input window, operand 0, single buffered']
    #allocation3 [shape = 's32[1]{0}', space=sflag, size = 0x4, scoped, tag = 'scoped memory for tpu_custom_call.1']
    #allocation4 [shape = 's32[1]{0}', space=sflag, size = 0x4, scoped, tag = 'scoped memory for tpu_custom_call.1']
    #allocation5 [shape = 'u8[16384]{0}', space=vmem, size = 0x4000, scoped, tag = 'input window, operand 1, single buffered']
    #allocation6 [shape = 's32[1]{0}', space=sflag, size = 0x4, scoped, tag = 'scoped memory for tpu_custom_call.1']
    #allocation7 [shape = 'u8[1024]{0}', space=vmem, size = 0x400, scoped, tag = 'output window, operand 0, single buffered']
    %7 = vsyncpa [#allocation3], 0
    %8 = vsyncpa [#allocation6], 0
    %9 = vsyncpa [#allocation4], 0
    // Predicated region
    $region2: #{tpu_custom_call.1} parent=1 // pred_check
      _
    $region3: #{tpu_custom_call.1} parent=1 // pred_check_branch
      %11 = sbr.rel (0) target = $region5
    $region4: #{tpu_custom_call.1} parent=1 // pred_region
      %s13 = ssub.s32 1024, 1024
      %14 = vsyncadd [#allocation3], %s13
      %s15 = sshll.u32 [#allocation2], 4
      %s16 = int_to_ptr.vmem [resolvable:$true] %s15
      %21 = dma.hbm_to_vmem [thread:$0]  %s0, 1024, %s16, [#allocation3], 256, 256, 16
    $region5: #{tpu_custom_call.1} parent=1 // pred_fallthru
      _
    // Predicated region
    $region6: #{tpu_custom_call.1} parent=1 // pred_check
      _
    $region7: #{tpu_custom_call.1} parent=1 // pred_check_branch
      %23 = sbr.rel (0) target = $region9
    $region8: #{tpu_custom_call.1} parent=1 // pred_region
      %s25 = ssub.s32 512, 512
      %26 = vsyncadd [#allocation6], %s25
      %s27 = sshll.u32 [#allocation5], 4
      %s28 = int_to_ptr.vmem [resolvable:$true] %s27
      %33 = dma.hbm_to_vmem [thread:$0]  %s1, 512, %s28, [#allocation6], 256, 256, 16
    $region9: #{tpu_custom_call.1} parent=1 // pred_fallthru
      _
    // Predicated region
    $region10: #{tpu_custom_call.1} parent=1 // pred_check
      _
    $region11: #{tpu_custom_call.1} parent=1 // pred_check_branch
      %35 = sbr.rel (0) target = $region13
    $region12: #{tpu_custom_call.1} parent=1 // pred_region
      %36 = dma.done [#allocation3], 1024
    $region13: #{tpu_custom_call.1} parent=1 // pred_fallthru
      _
    // Predicated region
    $region14: #{tpu_custom_call.1} parent=1 // pred_check
      _
    $region15: #{tpu_custom_call.1} parent=1 // pred_check_branch
      %38 = sbr.rel (0) target = $region17
    $region16: #{tpu_custom_call.1} parent=1 // pred_region
      %39 = dma.done [#allocation6], 512
    $region17: #{tpu_custom_call.1} parent=1 // pred_fallthru
      _
    %v40 = vld [vmem:[#allocation2] sm:$0xff]
    %v41 = vld [vmem:[#allocation2 + $0x8] sm:$0xff]
    %v42 = vld [vmem:[#allocation2 + $0x10] sm:$0xff]
    %v43 = vld [vmem:[#allocation2 + $0x18] sm:$0xff]
    %v44 = vld [vmem:[#allocation2 + $0x20] sm:$0xff]
    %v45 = vld [vmem:[#allocation2 + $0x28] sm:$0xff]
    %v46 = vld [vmem:[#allocation2 + $0x30] sm:$0xff]
    %v47 = vld [vmem:[#allocation2 + $0x38] sm:$0xff]
    %v48 = vld [vmem:[#allocation5] sm:$0xff]
    %v49 = vld [vmem:[#allocation5 + $0x8] sm:$0xff]
    %v50 = vld [vmem:[#allocation5 + $0x10] sm:$0xff]
    %v51 = vld [vmem:[#allocation5 + $0x18] sm:$0xff]
    %v52 = vmul.f32 %v40, %v48
    %v53 = vmul.f32 %v41, %v49
    %v54 = vmul.f32 %v42, %v50
    %v55 = vmul.f32 %v43, %v51
    %v56 = vmul.f32 %v44, %v48
    %v57 = vmul.f32 %v45, %v49
    %v58 = vmul.f32 %v46, %v50
    %v59 = vmul.f32 %v47, %v51
    %vm60 = vcmask 556032
    %v61 = vsel %vm60, %v53, 0.0
    %v62 = vadd.f32 %v52, %v61
    %63 = vadd.xlane.f32.xlu0 %v62
    %v64 = vpop.xlane.xlu0 %63
    %v65 = vsel %vm60, %v55, 0.0
    %v66 = vadd.f32 %v54, %v65
    %67 = vadd.xlane.f32.xlu0 %v66
    %v68 = vpop.xlane.xlu0 %67
    %v69 = vsel %vm60, %v57, 0.0
    %v70 = vadd.f32 %v56, %v69
    %71 = vadd.xlane.f32.xlu0 %v70
    %v72 = vpop.xlane.xlu0 %71
    %v73 = vsel %vm60, %v59, 0.0
    %v74 = vadd.f32 %v58, %v73
    %75 = vadd.xlane.f32.xlu0 %v74
    %v76 = vpop.xlane.xlu0 %75
    %v81 = vlaneseq
    %v82 = vand.u32 %v81, 127
    %v83 = vlaneseq
    %v84 = vshrl.u32 %v83, 7
    %v85 = vsub.s32 %v82, %v84
    %v86 = vrot.slane %v64, %v85
    %v87 = vadd.s32 %v82, 4294967288
    %v88 = vlaneseq
    %v89 = vshrl.u32 %v88, 7
    %v90 = vsub.s32 %v87, %v89
    %v91 = vrot.slane %v68, %v90
    %vm92 = vcmask 130112
    %v93 = vsel %vm92, %v91, %v86
    %v94 = vlaneseq
    %v95 = vshrl.u32 %v94, 7
    %v96 = vsub.s32 %v82, %v95
    %v97 = vrot.slane %v72, %v96
    %v98 = vlaneseq
    %v99 = vshrl.u32 %v98, 7
    %v100 = vsub.s32 %v87, %v99
    %v101 = vrot.slane %v76, %v100
    %v102 = vsel %vm92, %v101, %v97
    %vm103 = vcmask 1041409
    %v104 = vsel %vm103, %v102, %v93
    %vm106 = vcmask 123904
    %107 = vst.msk [vmem:[#allocation7] sm:$0x3] %vm106, %v104
    // Predicated region
    $region18: #{tpu_custom_call.1} parent=1 // pred_check
      _
    $region19: #{tpu_custom_call.1} parent=1 // pred_check_branch
      %109 = sbr.rel (0) target = $region21
    $region20: #{tpu_custom_call.1} parent=1 // pred_region
      %s111 = ssub.s32 32, 32
      %112 = vsyncadd [#allocation4], %s111
      %s114 = sshll.u32 [#allocation7], 4
      %s115 = int_to_ptr.vmem [resolvable:$true] %s114
      %117 = dma.vmem_to_hbm [thread:$0]  %s115, 32, %s2, [#allocation4]
    $region21: #{tpu_custom_call.1} parent=1 // pred_fallthru
      _
    // Predicated region
    $region22: #{tpu_custom_call.1} parent=1 // pred_check
      _
    $region23: #{tpu_custom_call.1} parent=1 // pred_check_branch
      %119 = sbr.rel (0) target = $region25
    $region24: #{tpu_custom_call.1} parent=1 // pred_region
      %120 = dma.done [#allocation4], 32
    $region25: #{tpu_custom_call.1} parent=1 // pred_fallthru
      _
    %121 = vsyncpa [#allocation3], 1
    %122 = vsyncpa [#allocation6], 1
    %123 = vsyncpa [#allocation4], 1

</llo_original>
